<compile_context>
chip_gen: v7x
topology: tpu7x:2x2x1
jax: 0.10.0
libtpu: 0.0.40
codegen_flags: <defaults>
</compile_context>

<pallas_src>
import jax
import jax.numpy as jnp
from jax.experimental import pallas as pl
from jax.experimental.pallas import tpu as pltpu

BN_EPS = 1e-5
MAX_TILE_H = 2048        # hidden-tile cap (v5e/v6e sweet spot per tile sweeps)
_B_PAD_EST = 1024        # batch assumption used only for VMEM budgeting


def _round_up(x, m):
    return ((x + m - 1) // m) * m


def _vmem_budget():
    """Scoped VMEM limit derived from the physical per-core capacity."""
    try:
        phys = int(pltpu.get_tpu_info().vmem_capacity_bytes)
    except Exception:
        phys = 64 * 1024 * 1024                      # v7x-safe lower bound
    limit = min(int(phys * 0.75), phys - (16 << 20))  # 48 MiB v7x, 96 MiB v5e/v6e
    return max(limit, 32 << 20)


def _network_kernel(inv_b_ref, x_ref, w1_ref, gamma_ref, beta_ref, w2_ref,
                    b2_ref, o_ref):
    # Grid = (k: hidden tile, reduction).  The output block index is constant
    # along k, so the (B_pad, n_pad) f32 output stays resident in VMEM and is
    # used directly as the accumulator.
    k = pl.program_id(0)

    @pl.when(k == 0)
    def _():
        # Initialize the resident output with the second-layer bias.
        o_ref[...] = jnp.broadcast_to(b2_ref[...], o_ref.shape)

    inv_b = inv_b_ref[0, 0]    # 1 / real batch size (SMEM scalar)

    # Linear 1 (no bias): bf16 operands, f32 MXU accumulation.
    h = jnp.dot(x_ref[...], w1_ref[...], preferred_element_type=jnp.float32)

    # BatchNorm1d (training-mode) stats for this hidden tile.  BN stats are
    # per-feature, so a hidden tile is self-contained.  Zero-padded batch rows
    # contribute nothing to either sum; divide by the real batch size.
    s = jnp.sum(h, axis=0, keepdims=True)
    ss = jnp.sum(h * h, axis=0, keepdims=True)
    mean = s * inv_b
    var = jnp.maximum(ss * inv_b - mean * mean, 0.0)   # biased var, clamped
    inv_std = jax.lax.rsqrt(var + BN_EPS)

    # Fold BN affine into one scale/shift, fuse ReLU, cast for the second GEMM.
    scale = gamma_ref[...] * inv_std
    shift = beta_ref[...] - mean * scale
    h_act = jnp.maximum(h * scale + shift, 0.0).astype(jnp.bfloat16)

    # Linear 2: accumulate this hidden tile's contribution into the output.
    o_ref[...] += jnp.dot(h_act, w2_ref[...], preferred_element_type=jnp.float32)


def prepare_params(params):
    """One-time glue: transpose to (in, out), pad to lane-dense multiples of 128,
    cast weights to bf16, and pick a generation-aware hidden tile size."""
    hidden, input_dim = params["w1"].shape
    out_dim = params["w2"].shape[0]

    d_pad = _round_up(input_dim, 128)
    n_pad = _round_up(out_dim, 128)

    vmem_limit = _vmem_budget()
    # Bytes independent of tile_h (x, resident output, b2; count double-buffered).
    fixed = 2 * (_B_PAD_EST * d_pad * 2) + 2 * (_B_PAD_EST * n_pad * 4) + 2 * (n_pad * 4)
    # Double-buffered bytes per unit of tile_h (w1/w2 bf16, gamma/beta f32).
    per_h = 2 * (2 * d_pad + 2 * n_pad + 2 * 4)
    avail = max(int(vmem_limit * 0.8) - fixed, per_h * 128)
    tile_h = (avail // per_h) // 128 * 128
    tile_h = max(128, min(tile_h, MAX_TILE_H, _round_up(hidden, 128)))
    h_pad = _round_up(hidden, tile_h)

    w1 = jnp.zeros((d_pad, h_pad), jnp.bfloat16)
    w1 = w1.at[:input_dim, :hidden].set(params["w1"].T.astype(jnp.bfloat16))
    w2 = jnp.zeros((h_pad, n_pad), jnp.bfloat16)
    w2 = w2.at[:hidden, :out_dim].set(params["w2"].T.astype(jnp.bfloat16))
    gamma = jnp.ones((1, h_pad), jnp.float32).at[0, :hidden].set(params["gamma"])
    beta = jnp.zeros((1, h_pad), jnp.float32).at[0, :hidden].set(params["beta"])
    b2 = jnp.zeros((1, n_pad), jnp.float32).at[0, :out_dim].set(params["b2"])

    return {
        "w1": w1, "gamma": gamma, "beta": beta, "w2": w2, "b2": b2,
        "dims": (input_dim, hidden, out_dim, d_pad, h_pad, n_pad),
        "tile_h": tile_h,
        "vmem_limit": vmem_limit,
    }


def network_forward(x, prep):
    """x: (B, input_dim) f32.  prep: output of prepare_params()."""
    b, d = x.shape
    input_dim, hidden, out_dim, d_pad, h_pad, n_pad = prep["dims"]
    tile_h = prep["tile_h"]
    assert d == input_dim

    b_pad = max(_round_up(b, 16), 16)    # dense bf16 sublane packing
    x_pad = jnp.zeros((b_pad, d_pad), jnp.bfloat16)
    x_pad = x_pad.at[:b, :d].set(x.astype(jnp.bfloat16))

    # 1/batch as an SMEM scalar (no recompile when only the batch count changes
    # within the same padded shape).
    inv_b = jnp.full((1, 1), 1.0 / b, jnp.float32)

    out = pl.pallas_call(
        _network_kernel,
        out_shape=jax.ShapeDtypeStruct((b_pad, n_pad), jnp.float32),
        grid_spec=pltpu.PrefetchScalarGridSpec(
            num_scalar_prefetch=0,
            grid=(h_pad // tile_h,),
            in_specs=[
                pl.BlockSpec(memory_space=pltpu.MemorySpace.SMEM),    # 1/b scalar
                pl.BlockSpec((b_pad, d_pad), lambda k: (0, 0)),       # x (resident)
                pl.BlockSpec((d_pad, tile_h), lambda k: (0, k)),      # w1 tile
                pl.BlockSpec((1, tile_h), lambda k: (0, k)),          # gamma tile
                pl.BlockSpec((1, tile_h), lambda k: (0, k)),          # beta tile
                pl.BlockSpec((tile_h, n_pad), lambda k: (k, 0)),      # w2 tile
                pl.BlockSpec((1, n_pad), lambda k: (0, 0)),           # b2
            ],
            out_specs=pl.BlockSpec((b_pad, n_pad), lambda k: (0, 0)), # resident acc
        ),
        compiler_params=pltpu.CompilerParams(
            dimension_semantics=("arbitrary",),
            vmem_limit_bytes=prep["vmem_limit"],
        ),
    )(inv_b, x_pad, prep["w1"], prep["gamma"], prep["beta"], prep["w2"], prep["b2"])

    return out[:b, :out_dim]


def init_params(key, input_dim, hidden, out_dim):
    """Deterministic synthetic parameters with torch-like layouts."""
    k1, k2, k3 = jax.random.split(key, 3)
    bound1 = 1.0 / (input_dim ** 0.5)
    w1 = jax.random.uniform(k1, (hidden, input_dim), jnp.float32, -bound1, bound1)
    bound2 = 1.0 / (hidden ** 0.5)
    w2 = jax.random.uniform(k2, (out_dim, hidden), jnp.float32, -bound2, bound2)
    b2 = jax.random.uniform(k3, (out_dim,), jnp.float32, -bound2, bound2)
    gamma = jnp.ones((hidden,), jnp.float32)   # BatchNorm1d affine weight
    beta = jnp.zeros((hidden,), jnp.float32)   # BatchNorm1d affine bias
    return {"w1": w1, "gamma": gamma, "beta": beta, "w2": w2, "b2": b2}


def reference_forward(x, params):
    """Pure-JAX f32 reference matching PyTorch training-mode semantics."""
    h = x @ params["w1"].T
    mean = jnp.mean(h, axis=0, keepdims=True)
    var = jnp.mean((h - mean) ** 2, axis=0, keepdims=True)  # biased, like BN
    h = (h - mean) / jnp.sqrt(var + BN_EPS)
    h = h * params["gamma"][None, :] + params["beta"][None, :]
    h = jnp.maximum(h, 0.0)
    return h @ params["w2"].T + params["b2"][None, :]


if __name__ == "__main__":
    B, INPUT_DIM, HIDDEN, OUT_DIM = 8, 32, 32, 16

    key = jax.random.PRNGKey(0)
    kx, kp = jax.random.split(key)
    x = jax.random.normal(kx, (B, INPUT_DIM), jnp.float32)
    params = init_params(kp, INPUT_DIM, HIDDEN, OUT_DIM)
    prep = prepare_params(params)

    out = network_forward(x, prep)
    out = jax.block_until_ready(out)

    ref = reference_forward(x, params)
    assert out.shape == (B, OUT_DIM)
    max_err = float(jnp.max(jnp.abs(out - ref)))
    # bf16 GEMMs -> relaxed tolerance vs the f32 reference.
    assert jnp.allclose(out, ref, atol=5e-2, rtol=5e-2), f"mismatch vs reference (max abs err {max_err})"

    print("KERNEL_OK")
</pallas_src>

<mosaic_0001>
module attributes {stable_mosaic.version = 11 : i64} {
  func.func @_network_kernel(%arg0: i32, %arg1: memref<1x1xf32, #tpu.memory_space<smem>>, %arg2: memref<16x128xbf16, #tpu.memory_space<vmem>>, %arg3: memref<128x128xbf16, #tpu.memory_space<vmem>>, %arg4: memref<1x128xf32, #tpu.memory_space<vmem>>, %arg5: memref<1x128xf32, #tpu.memory_space<vmem>>, %arg6: memref<128x128xbf16, #tpu.memory_space<vmem>>, %arg7: memref<1x128xf32, #tpu.memory_space<vmem>>, %arg8: memref<16x128xf32, #tpu.memory_space<vmem>>) attributes {dimension_semantics = [#tpu.dimension_semantics<arbitrary>], iteration_bounds = array<i64: 1>, scalar_prefetch = 0 : i64, scratch_operands = 0 : i64, tpu.core_type = #tpu.core_type<tc>, window_params = [{transform_indices = @transform_0, window_bounds = array<i64: 1, 1>}, {pipeline_mode = #tpu.pipeline_mode<synchronous>, transform_indices = @transform_1, window_bounds = array<i64: 16, 128>}, {transform_indices = @transform_2, window_bounds = array<i64: 128, 128>}, {transform_indices = @transform_3, window_bounds = array<i64: 1, 128>}, {transform_indices = @transform_4, window_bounds = array<i64: 1, 128>}, {transform_indices = @transform_5, window_bounds = array<i64: 128, 128>}, {pipeline_mode = #tpu.pipeline_mode<synchronous>, transform_indices = @transform_6, window_bounds = array<i64: 1, 128>}, {pipeline_mode = #tpu.pipeline_mode<synchronous>, transform_indices = @transform_7, window_bounds = array<i64: 16, 128>}]} {
    %c0_i32 = arith.constant 0 : i32
    %0 = arith.cmpi eq, %arg0, %c0_i32 : i32
    %1 = arith.extui %0 : i1 to i32
    %c0_i32_0 = arith.constant 0 : i32
    %2 = arith.cmpi ne, %1, %c0_i32_0 : i32
    scf.if %2 {
      %c0_22 = arith.constant 0 : index
      %c0_23 = arith.constant 0 : index
      %40 = vector.load %arg7[%c0_22, %c0_23] : memref<1x128xf32, #tpu.memory_space<vmem>>, vector<1x128xf32>
      %41 = vector.shape_cast %40 : vector<1x128xf32> to vector<1x128xf32>
      %42 = vector.broadcast %41 : vector<1x128xf32> to vector<16x128xf32>
      %c0_24 = arith.constant 0 : index
      %c0_25 = arith.constant 0 : index
      %43 = vector.load %arg8[%c0_24, %c0_25] : memref<16x128xf32, #tpu.memory_space<vmem>>, vector<16x128xf32>
      tpu.vector_store %arg8[%c0_24, %c0_25], %42 {strides = array<i32>} : memref<16x128xf32, #tpu.memory_space<vmem>>, vector<16x128xf32>,
    } else {
    }
    %c0 = arith.constant 0 : index
    %c0_1 = arith.constant 0 : index
    %3 = memref.load %arg1[%c0, %c0_1] : memref<1x1xf32, #tpu.memory_space<smem>>
    %c0_2 = arith.constant 0 : index
    %c0_3 = arith.constant 0 : index
    %4 = vector.load %arg2[%c0_2, %c0_3] : memref<16x128xbf16, #tpu.memory_space<vmem>>, vector<16x128xbf16>
    %c0_4 = arith.constant 0 : index
    %c0_5 = arith.constant 0 : index
    %5 = vector.load %arg3[%c0_4, %c0_5] : memref<128x128xbf16, #tpu.memory_space<vmem>>, vector<128x128xbf16>
    %cst = arith.constant dense<0.000000e+00> : vector<16x128xf32>
    %6 = tpu.matmul %4, %5, %cst {dimension_numbers = #tpu.dot_dimension_numbers<[1], [0], [0], [1], [0, 0, 1, 1], [], []>} : vector<16x128xbf16>, vector<128x128xbf16>, vector<16x128xf32> -> vector<16x128xf32>
    %cst_6 = arith.constant dense<0.000000e+00> : vector<128xf32>
    %7 = vector.multi_reduction <add>, %6, %cst_6 [0] : vector<16x128xf32> to vector<128xf32>
    %8 = vector.shape_cast %7 : vector<128xf32> to vector<1x128xf32>
    %9 = arith.mulf %6, %6 : vector<16x128xf32>
    %cst_7 = arith.constant dense<0.000000e+00> : vector<128xf32>
    %10 = vector.multi_reduction <add>, %9, %cst_7 [0] : vector<16x128xf32> to vector<128xf32>
    %11 = vector.shape_cast %10 : vector<128xf32> to vector<1x128xf32>
    %12 = vector.broadcast %3 : f32 to vector<1x128xf32>
    %13 = arith.mulf %8, %12 : vector<1x128xf32>
    %14 = vector.broadcast %3 : f32 to vector<1x128xf32>
    %15 = arith.mulf %11, %14 : vector<1x128xf32>
    %16 = arith.mulf %13, %13 : vector<1x128xf32>
    %17 = arith.subf %15, %16 : vector<1x128xf32>
    %cst_8 = arith.constant 0.000000e+00 : f32
    %18 = vector.broadcast %cst_8 : f32 to vector<1x128xf32>
    %19 = arith.maximumf %17, %18 : vector<1x128xf32>
    %cst_9 = arith.constant 9.99999974E-6 : f32
    %20 = vector.broadcast %cst_9 : f32 to vector<1x128xf32>
    %21 = arith.addf %19, %20 : vector<1x128xf32>
    %22 = math.rsqrt %21 : vector<1x128xf32>
    %c0_10 = arith.constant 0 : index
    %c0_11 = arith.constant 0 : index
    %23 = vector.load %arg4[%c0_10, %c0_11] : memref<1x128xf32, #tpu.memory_space<vmem>>, vector<1x128xf32>
    %24 = arith.mulf %23, %22 : vector<1x128xf32>
    %c0_12 = arith.constant 0 : index
    %c0_13 = arith.constant 0 : index
    %25 = vector.load %arg5[%c0_12, %c0_13] : memref<1x128xf32, #tpu.memory_space<vmem>>, vector<1x128xf32>
    %26 = arith.mulf %13, %24 : vector<1x128xf32>
    %27 = arith.subf %25, %26 : vector<1x128xf32>
    %28 = vector.broadcast %24 : vector<1x128xf32> to vector<16x128xf32>
    %29 = arith.mulf %6, %28 : vector<16x128xf32>
    %30 = vector.broadcast %27 : vector<1x128xf32> to vector<16x128xf32>
    %31 = arith.addf %29, %30 : vector<16x128xf32>
    %cst_14 = arith.constant 0.000000e+00 : f32
    %32 = vector.broadcast %cst_14 : f32 to vector<16x128xf32>
    %33 = arith.maximumf %31, %32 : vector<16x128xf32>
    %34 = arith.truncf %33 : vector<16x128xf32> to vector<16x128xbf16>
    %c0_15 = arith.constant 0 : index
    %c0_16 = arith.constant 0 : index
    %35 = vector.load %arg8[%c0_15, %c0_16] : memref<16x128xf32, #tpu.memory_space<vmem>>, vector<16x128xf32>
    %c0_17 = arith.constant 0 : index
    %c0_18 = arith.constant 0 : index
    %36 = vector.load %arg6[%c0_17, %c0_18] : memref<128x128xbf16, #tpu.memory_space<vmem>>, vector<128x128xbf16>
    %cst_19 = arith.constant dense<0.000000e+00> : vector<16x128xf32>
    %37 = tpu.matmul %34, %36, %cst_19 {dimension_numbers = #tpu.dot_dimension_numbers<[1], [0], [0], [1], [0, 0, 1, 1], [], []>} : vector<16x128xbf16>, vector<128x128xbf16>, vector<16x128xf32> -> vector<16x128xf32>
    %38 = arith.addf %35, %37 : vector<16x128xf32>
    %c0_20 = arith.constant 0 : index
    %c0_21 = arith.constant 0 : index
    %39 = vector.load %arg8[%c0_20, %c0_21] : memref<16x128xf32, #tpu.memory_space<vmem>>, vector<16x128xf32>
    tpu.vector_store %arg8[%c0_20, %c0_21], %38 {strides = array<i32>} : memref<16x128xf32, #tpu.memory_space<vmem>>, vector<16x128xf32>,
    return
  }
  func.func @transform_0(%arg0: i32) -> (i32, i32) {
    %c0_i32 = arith.constant 0 : i32
    %c0_i32_0 = arith.constant 0 : i32
    %c0_i32_1 = arith.constant 0 : i32
    return %c0_i32, %c0_i32_0 : i32, i32
  }
  func.func @transform_1(%arg0: i32) -> (i32, i32) {
    %c0_i32 = arith.constant 0 : i32
    %c0_i32_0 = arith.constant 0 : i32
    %c0_i32_1 = arith.constant 0 : i32
    return %c0_i32, %c0_i32_0 : i32, i32
  }
  func.func @transform_2(%arg0: i32) -> (i32, i32) {
    %c0_i32 = arith.constant 0 : i32
    %c0_i32_0 = arith.constant 0 : i32
    return %c0_i32, %arg0 : i32, i32
  }
  func.func @transform_3(%arg0: i32) -> (i32, i32) {
    %c0_i32 = arith.constant 0 : i32
    %c0_i32_0 = arith.constant 0 : i32
    return %c0_i32, %arg0 : i32, i32
  }
  func.func @transform_4(%arg0: i32) -> (i32, i32) {
    %c0_i32 = arith.constant 0 : i32
    %c0_i32_0 = arith.constant 0 : i32
    return %c0_i32, %arg0 : i32, i32
  }
  func.func @transform_5(%arg0: i32) -> (i32, i32) {
    %c0_i32 = arith.constant 0 : i32
    %c0_i32_0 = arith.constant 0 : i32
    return %arg0, %c0_i32 : i32, i32
  }
  func.func @transform_6(%arg0: i32) -> (i32, i32) {
    %c0_i32 = arith.constant 0 : i32
    %c0_i32_0 = arith.constant 0 : i32
    %c0_i32_1 = arith.constant 0 : i32
    return %c0_i32, %c0_i32_0 : i32, i32
  }
  func.func @transform_7(%arg0: i32) -> (i32, i32) {
    %c0_i32 = arith.constant 0 : i32
    %c0_i32_0 = arith.constant 0 : i32
    %c0_i32_1 = arith.constant 0 : i32
    return %c0_i32, %c0_i32_0 : i32, i32
  }
}

</mosaic_0001>

<llo_original>
// kernel: tpu_custom_call.1
$region0: #{tpu_custom_call.1}
  #allocation0 [shape = 'u32[]', space=smem, size = 0x4, offset = 0x4, fixed_abs, tag = 'smem constant byte address 0x4 - core index']
  #allocation1 [shape = 'u32[144,128]{1,0:T(1,128)}', space=vmem, size = 0x12000, scoped, tag = 'internal scratch']
  #allocation2 [shape = 'f32[1,1]{1,0:T(1,128)S(6)}', space=smem, size = 0x200, scoped, tag = 'scoped memory for tpu_custom_call.1']
  %s0 = inlined_call_operand.<no memory space> [shape: f32[1,1], index: 0, kind: input, shape index: {}]
  %s1 = inlined_call_operand.hbm [shape: bf16[16,128], index: 1, kind: input, shape index: {}]
  %s2 = inlined_call_operand.hbm [shape: bf16[128,128], index: 2, kind: input, shape index: {}]
  %s3 = inlined_call_operand.vmem [shape: f32[1,128], index: 3, kind: input, shape index: {}]
  %s4 = inlined_call_operand.vmem [shape: f32[1,128], index: 4, kind: input, shape index: {}]
  %s5 = inlined_call_operand.hbm [shape: bf16[128,128], index: 5, kind: input, shape index: {}]
  %s6 = inlined_call_operand.vmem [shape: f32[1,128], index: 6, kind: input, shape index: {}]
  %s7 = inlined_call_operand.hbm [shape: f32[16,128], index: 7, kind: output, shape index: {}]
  %s8 = sld [smem:[#allocation0]]
  $region54: #{tpu_custom_call.1} parent=0
    _
  %s10 = ssub.s32 1, %s8
  %s11 = scalar_select 0, %s10, %s8
  %12 = sst [smem:[#allocation2]] %s0
  $region1: #{tpu_custom_call.1} parent=0
    #allocation3 [shape = 'u8[4096]{0}', space=vmem, size = 0x1000, scoped, tag = 'input window, operand 1, single buffered']
    #allocation4 [shape = 's32[1]{0}', space=sflag, size = 0x4, scoped, tag = 'scoped memory for tpu_custom_call.1']
    #allocation5 [shape = 's32[1]{0}', space=sflag, size = 0x4, scoped, tag = 'scoped memory for tpu_custom_call.1']
    #allocation6 [shape = 'u8[32768]{0}', space=vmem, size = 0x8000, scoped, tag = 'input window, operand 2, single buffered']
    #allocation7 [shape = 's32[1]{0}', space=sflag, size = 0x4, scoped, tag = 'scoped memory for tpu_custom_call.1']
    #allocation8 [shape = 'u8[32768]{0}', space=vmem, size = 0x8000, scoped, tag = 'input window, operand 5, single buffered']
    #allocation9 [shape = 'u8[8192]{0}', space=vmem, size = 0x2000, scoped, tag = 'output window, operand 0, single buffered']
    %13 = vsyncpa [#allocation4], 0
    %14 = vsyncpa [#allocation7], 0
    %15 = vsyncpa [#allocation5], 0
    // Predicated region
    $region2: #{tpu_custom_call.1} parent=1 // pred_check
      _
    $region3: #{tpu_custom_call.1} parent=1 // pred_check_branch
      %17 = sbr.rel (0) target = $region5
    $region4: #{tpu_custom_call.1} parent=1 // pred_region
      _
    $region5: #{tpu_custom_call.1} parent=1 // pred_fallthru
      _
    // Predicated region
    $region6: #{tpu_custom_call.1} parent=1 // pred_check
      _
    $region7: #{tpu_custom_call.1} parent=1 // pred_check_branch
      %19 = sbr.rel (0) target = $region9
    $region8: #{tpu_custom_call.1} parent=1 // pred_region
      %s21 = ssub.s32 128, 128
      %22 = vsyncadd [#allocation4], %s21
      %s23 = sshll.u32 [#allocation3], 4
      %s24 = int_to_ptr.vmem [resolvable:$true] %s23
      %29 = dma.hbm_to_vmem [thread:$0]  %s1, 128, %s24, [#allocation4], 64, 64, 4
    $region9: #{tpu_custom_call.1} parent=1 // pred_fallthru
      _
    // Predicated region
    $region10: #{tpu_custom_call.1} parent=1 // pred_check
      _
    $region11: #{tpu_custom_call.1} parent=1 // pred_check_branch
      %31 = sbr.rel (0) target = $region13
    $region12: #{tpu_custom_call.1} parent=1 // pred_region
      %s33 = ssub.s32 1024, 1024
      %34 = vsyncadd [#allocation7], %s33
      %s35 = sshll.u32 [#allocation6], 4
      %s36 = int_to_ptr.vmem [resolvable:$true] %s35
      %41 = dma.hbm_to_vmem [thread:$0]  %s2, 1024, %s36, [#allocation7], 64, 64, 4
    $region13: #{tpu_custom_call.1} parent=1 // pred_fallthru
      _
    // Predicated region
    $region14: #{tpu_custom_call.1} parent=1 // pred_check
      _
    $region15: #{tpu_custom_call.1} parent=1 // pred_check_branch
      %43 = sbr.rel (0) target = $region17
    $region16: #{tpu_custom_call.1} parent=1 // pred_region
      _
    $region17: #{tpu_custom_call.1} parent=1 // pred_fallthru
      _
    // Predicated region
    $region18: #{tpu_custom_call.1} parent=1 // pred_check
      _
    $region19: #{tpu_custom_call.1} parent=1 // pred_check_branch
      %45 = sbr.rel (0) target = $region21
    $region20: #{tpu_custom_call.1} parent=1 // pred_region
      _
    $region21: #{tpu_custom_call.1} parent=1 // pred_fallthru
      _
    // Predicated region
    $region22: #{tpu_custom_call.1} parent=1 // pred_check
      _
    $region23: #{tpu_custom_call.1} parent=1 // pred_check_branch
      %47 = sbr.rel (0) target = $region25
    $region24: #{tpu_custom_call.1} parent=1 // pred_region
      %s49 = ssub.s32 1024, 1024
      %50 = vsyncadd [#allocation7], %s49
      %s51 = sshll.u32 [#allocation8], 4
      %s52 = int_to_ptr.vmem [resolvable:$true] %s51
      %57 = dma.hbm_to_vmem [thread:$0]  %s5, 1024, %s52, [#allocation7], 64, 64, 4
    $region25: #{tpu_custom_call.1} parent=1 // pred_fallthru
      _
    // Predicated region
    $region26: #{tpu_custom_call.1} parent=1 // pred_check
      _
    $region27: #{tpu_custom_call.1} parent=1 // pred_check_branch
      %59 = sbr.rel (0) target = $region29
    $region28: #{tpu_custom_call.1} parent=1 // pred_region
      _
    $region29: #{tpu_custom_call.1} parent=1 // pred_fallthru
      _
    // Predicated region
    $region30: #{tpu_custom_call.1} parent=1 // pred_check
      _
    $region31: #{tpu_custom_call.1} parent=1 // pred_check_branch
      %61 = sbr.rel (0) target = $region33
    $region32: #{tpu_custom_call.1} parent=1 // pred_region
      %62 = dma.done [#allocation4], 128
    $region33: #{tpu_custom_call.1} parent=1 // pred_fallthru
      _
    // Predicated region
    $region34: #{tpu_custom_call.1} parent=1 // pred_check
      _
    $region35: #{tpu_custom_call.1} parent=1 // pred_check_branch
      %64 = sbr.rel (0) target = $region37
    $region36: #{tpu_custom_call.1} parent=1 // pred_region
      %65 = dma.done [#allocation7], 1024
    $region37: #{tpu_custom_call.1} parent=1 // pred_fallthru
      _
    // Predicated region
    $region38: #{tpu_custom_call.1} parent=1 // pred_check
      _
    $region39: #{tpu_custom_call.1} parent=1 // pred_check_branch
      %67 = sbr.rel (0) target = $region41
    $region40: #{tpu_custom_call.1} parent=1 // pred_region
      %68 = dma.done [#allocation7], 1024
    $region41: #{tpu_custom_call.1} parent=1 // pred_fallthru
      _
    %p70 = scmp.eq.s32.totalorder 0, 0
    // Predicated region
    $region42: #{tpu_custom_call.1} parent=1 // pred_check
      %p71 = pneg %p70
    $region43: #{tpu_custom_call.1} parent=1 // pred_check_branch
      %73 = sbr.rel (%p71) target = $region45
    $region44: #{tpu_custom_call.1} parent=1 // pred_region
      %v74 = vld [vmem:[%s6] sm:$0x1]
      %v76 = vlaneseq
      %v77 = vshrl.u32 %v76, 7
      %v78 = vsub.s32 0, %v77
      %v79 = vrot.slane %v74, %v78
      %81 = vst [vmem:[#allocation9] sm:$0xff] %v79
      %82 = vst [vmem:[#allocation9 + $0x8] sm:$0xff] %v79
    $region45: #{tpu_custom_call.1} parent=1 // pred_fallthru
      _
    %s83 = sld [smem:[#allocation2]]
    %v84 = vld [vmem:[#allocation3] sm:$0xf]
    %v85 = vld [vmem:[#allocation3 + $0x4] sm:$0xf]
    %v86 = vld [vmem:[#allocation6] sm:$0xf]
    %v87 = vld [vmem:[#allocation6 + $0x4] sm:$0xf]
    %v88 = vld [vmem:[#allocation6 + $0x8] sm:$0xf]
    %v89 = vld [vmem:[#allocation6 + $0xc] sm:$0xf]
    %v90 = vld [vmem:[#allocation6 + $0x10] sm:$0xf]
    %v91 = vld [vmem:[#allocation6 + $0x14] sm:$0xf]
    %v92 = vld [vmem:[#allocation6 + $0x18] sm:$0xf]
    %v93 = vld [vmem:[#allocation6 + $0x1c] sm:$0xf]
    %v94 = vld [vmem:[#allocation6 + $0x20] sm:$0xf]
    %v95 = vld [vmem:[#allocation6 + $0x24] sm:$0xf]
    %v96 = vld [vmem:[#allocation6 + $0x28] sm:$0xf]
    %v97 = vld [vmem:[#allocation6 + $0x2c] sm:$0xf]
    %v98 = vld [vmem:[#allocation6 + $0x30] sm:$0xf]
    %v99 = vld [vmem:[#allocation6 + $0x34] sm:$0xf]
    %v100 = vld [vmem:[#allocation6 + $0x38] sm:$0xf]
    %v101 = vld [vmem:[#allocation6 + $0x3c] sm:$0xf]
    %v104 = vunpack.c.l.b16 %v84
    %v105 = vunpack.c.l.b16 %v85
    %v106 = vpack.c.b16 %v105, %v104
    %v124 = vunpack.c.l.b16 %v86
    %v125 = vunpack.c.l.b16 %v87
    %v126 = vunpack.c.l.b16 %v88
    %v127 = vunpack.c.l.b16 %v89
    %v128 = vunpack.c.l.b16 %v90
    %v129 = vunpack.c.l.b16 %v91
    %v130 = vunpack.c.l.b16 %v92
    %v131 = vunpack.c.l.b16 %v93
    %v132 = vunpack.c.l.b16 %v94
    %v133 = vunpack.c.l.b16 %v95
    %v134 = vunpack.c.l.b16 %v96
    %v135 = vunpack.c.l.b16 %v97
    %v136 = vunpack.c.l.b16 %v98
    %v137 = vunpack.c.l.b16 %v99
    %v138 = vunpack.c.l.b16 %v100
    %v139 = vunpack.c.l.b16 %v101
    %v140 = vpack.c.b16 %v125, %v124
    %v141 = vpack.c.b16 %v127, %v126
    %v142 = vpack.c.b16 %v129, %v128
    %v143 = vpack.c.b16 %v131, %v130
    %v144 = vpack.c.b16 %v133, %v132
    %v145 = vpack.c.b16 %v135, %v134
    %v146 = vpack.c.b16 %v137, %v136
    %v147 = vpack.c.b16 %v139, %v138
    %156 = vmatprep.subr.bf16.mxu0 0
    %157 = vmatpush1.bf16.msra.mxu0 %v140
    %158 = vmatprep.subr.bf16.mxu0 0
    %159 = vmatpush1.bf16.msra.mxu0 %v141
    %160 = vmatprep.subr.bf16.mxu0 0
    %161 = vmatpush1.bf16.msra.mxu0 %v142
    %162 = vmatprep.subr.bf16.mxu0 0
    %163 = vmatpush1.bf16.msra.mxu0 %v143
    %164 = vmatprep.subr.bf16.mxu0 0
    %165 = vmatpush1.bf16.msra.mxu0 %v144
    %166 = vmatprep.subr.bf16.mxu0 0
    %167 = vmatpush1.bf16.msra.mxu0 %v145
    %168 = vmatprep.subr.bf16.mxu0 0
    %169 = vmatpush1.bf16.msra.mxu0 %v146
    %170 = vmatprep.subr.bf16.mxu0 0
    %171 = vmatpush1.bf16.msra.mxu0 %v147
    %172 = vmatprep.subr.bf16.mxu0 0
    %173 = vmatpush1.bf16.msra.mxu0 0
    %174 = vmatprep.subr.bf16.mxu0 0
    %175 = vmatpush1.bf16.msra.mxu0 0
    %176 = vmatprep.subr.bf16.mxu0 0
    %177 = vmatpush1.bf16.msra.mxu0 0
    %178 = vmatprep.subr.bf16.mxu0 0
    %179 = vmatpush1.bf16.msra.mxu0 0
    %180 = vmatprep.subr.bf16.mxu0 0
    %181 = vmatpush1.bf16.msra.mxu0 0
    %182 = vmatprep.subr.bf16.mxu0 0
    %183 = vmatpush1.bf16.msra.mxu0 0
    %184 = vmatprep.subr.bf16.mxu0 0
    %185 = vmatpush1.bf16.msra.mxu0 0
    %186 = vmatprep.subr.bf16.mxu0 0
    %187 = vmatpush1.bf16.msra.mxu0 0
    %188 = vmatprep.mubr.bf16.mxu0 0
    %189 = vmatmul.mubr.bf16.gmra.mrb[0].mxu0 %v106
    %v190 = vpop.f32.mrb[0].mxu0
    %v191 = vadd.f32 0.0, %v190
    %v192 = vpop.f32.mrb[0].mxu0
    %v193 = vpop.f32.mrb[0].mxu0
    %v194 = vadd.f32 0.0, %v193
    %v195 = vpop.f32.mrb[0].mxu0
    %196 = vdwg.mxu0
    %v197 = vadd.f32 %v191, %v194
    %v198 = vrot.slane %v197, 4
    %v199 = vadd.f32 %v197, %v198
    %v200 = vrot.slane %v199, 2
    %v201 = vadd.f32 %v199, %v200
    %v202 = vrot.slane %v201, 1
    %v203 = vadd.f32 %v201, %v202
    %v204 = vmul.f32 %v191, %v191
    %v205 = vmul.f32 %v194, %v194
    %v206 = vadd.f32 %v204, %v205
    %v207 = vrot.slane %v206, 4
    %v208 = vadd.f32 %v206, %v207
    %v209 = vrot.slane %v208, 2
    %v210 = vadd.f32 %v208, %v209
    %v211 = vrot.slane %v210, 1
    %v212 = vadd.f32 %v210, %v211
    %v213 = vstv %s83
    %v214 = vmul.f32 %v203, %v213
    %v215 = vmul.f32 %v212, %v213
    %v216 = vmul.f32 %v214, %v214
    %v217 = vsub.f32 %v215, %v216
    %v218 = vmax.f32 %v217, 0.0
    %v219 = vadd.f32 %v218, 1e-05
    %v220 = vrsqrt.pop %v219
    %v221 = vld [vmem:[%s3] sm:$0x1]
    %v222 = vmul.f32 %v221, %v220
    %v223 = vld [vmem:[%s4] sm:$0x1]
    %v224 = vmul.f32 %v214, %v222
    %v225 = vsub.f32 %v223, %v224
    %v227 = vlaneseq
    %v228 = vshrl.u32 %v227, 7
    %v229 = vsub.s32 0, %v228
    %v230 = vrot.slane %v222, %v229
    %v232 = vmul.f32 %v191, %v230
    %v233 = vmul.f32 %v194, %v230
    %v235 = vlaneseq
    %v236 = vshrl.u32 %v235, 7
    %v237 = vsub.s32 0, %v236
    %v238 = vrot.slane %v225, %v237
    %v240 = vadd.f32 %v232, %v238
    %v241 = vadd.f32 %v233, %v238
    %v242 = vmax.f32 %v240, 0.0
    %v243 = vmax.f32 %v241, 0.0
    %v244 = vpack.c.bf16 %v243, %v242
    %v245 = vld [vmem:[#allocation9] sm:$0xff]
    %v246 = vld [vmem:[#allocation9 + $0x8] sm:$0xff]
    %v247 = vld [vmem:[#allocation8] sm:$0xf]
    %v248 = vld [vmem:[#allocation8 + $0x4] sm:$0xf]
    %v249 = vld [vmem:[#allocation8 + $0x8] sm:$0xf]
    %v250 = vld [vmem:[#allocation8 + $0xc] sm:$0xf]
    %v251 = vld [vmem:[#allocation8 + $0x10] sm:$0xf]
    %v252 = vld [vmem:[#allocation8 + $0x14] sm:$0xf]
    %v253 = vld [vmem:[#allocation8 + $0x18] sm:$0xf]
    %v254 = vld [vmem:[#allocation8 + $0x1c] sm:$0xf]
    %v255 = vld [vmem:[#allocation8 + $0x20] sm:$0xf]
    %v256 = vld [vmem:[#allocation8 + $0x24] sm:$0xf]
    %v257 = vld [vmem:[#allocation8 + $0x28] sm:$0xf]
    %v258 = vld [vmem:[#allocation8 + $0x2c] sm:$0xf]
    %v259 = vld [vmem:[#allocation8 + $0x30] sm:$0xf]
    %v260 = vld [vmem:[#allocation8 + $0x34] sm:$0xf]
    %v261 = vld [vmem:[#allocation8 + $0x38] sm:$0xf]
    %v262 = vld [vmem:[#allocation8 + $0x3c] sm:$0xf]
    %v279 = vunpack.c.l.b16 %v247
    %v280 = vunpack.c.l.b16 %v248
    %v281 = vunpack.c.l.b16 %v249
    %v282 = vunpack.c.l.b16 %v250
    %v283 = vunpack.c.l.b16 %v251
    %v284 = vunpack.c.l.b16 %v252
    %v285 = vunpack.c.l.b16 %v253
    %v286 = vunpack.c.l.b16 %v254
    %v287 = vunpack.c.l.b16 %v255
    %v288 = vunpack.c.l.b16 %v256
    %v289 = vunpack.c.l.b16 %v257
    %v290 = vunpack.c.l.b16 %v258
    %v291 = vunpack.c.l.b16 %v259
    %v292 = vunpack.c.l.b16 %v260
    %v293 = vunpack.c.l.b16 %v261
    %v294 = vunpack.c.l.b16 %v262
    %v295 = vpack.c.b16 %v280, %v279
    %v296 = vpack.c.b16 %v282, %v281
    %v297 = vpack.c.b16 %v284, %v283
    %v298 = vpack.c.b16 %v286, %v285
    %v299 = vpack.c.b16 %v288, %v287
    %v300 = vpack.c.b16 %v290, %v289
    %v301 = vpack.c.b16 %v292, %v291
    %v302 = vpack.c.b16 %v294, %v293
    %311 = vmatprep.subr.bf16.mxu0 0
    %312 = vmatpush1.bf16.msra.mxu0 %v295
    %313 = vmatprep.subr.bf16.mxu0 0
    %314 = vmatpush1.bf16.msra.mxu0 %v296
    %315 = vmatprep.subr.bf16.mxu0 0
    %316 = vmatpush1.bf16.msra.mxu0 %v297
    %317 = vmatprep.subr.bf16.mxu0 0
    %318 = vmatpush1.bf16.msra.mxu0 %v298
    %319 = vmatprep.subr.bf16.mxu0 0
    %320 = vmatpush1.bf16.msra.mxu0 %v299
    %321 = vmatprep.subr.bf16.mxu0 0
    %322 = vmatpush1.bf16.msra.mxu0 %v300
    %323 = vmatprep.subr.bf16.mxu0 0
    %324 = vmatpush1.bf16.msra.mxu0 %v301
    %325 = vmatprep.subr.bf16.mxu0 0
    %326 = vmatpush1.bf16.msra.mxu0 %v302
    %327 = vmatprep.subr.bf16.mxu0 0
    %328 = vmatpush1.bf16.msra.mxu0 0
    %329 = vmatprep.subr.bf16.mxu0 0
    %330 = vmatpush1.bf16.msra.mxu0 0
    %331 = vmatprep.subr.bf16.mxu0 0
    %332 = vmatpush1.bf16.msra.mxu0 0
    %333 = vmatprep.subr.bf16.mxu0 0
    %334 = vmatpush1.bf16.msra.mxu0 0
    %335 = vmatprep.subr.bf16.mxu0 0
    %336 = vmatpush1.bf16.msra.mxu0 0
    %337 = vmatprep.subr.bf16.mxu0 0
    %338 = vmatpush1.bf16.msra.mxu0 0
    %339 = vmatprep.subr.bf16.mxu0 0
    %340 = vmatpush1.bf16.msra.mxu0 0
    %341 = vmatprep.subr.bf16.mxu0 0
    %342 = vmatpush1.bf16.msra.mxu0 0
    %343 = vmatprep.mubr.bf16.mxu0 0
    %344 = vmatmul.mubr.bf16.gmra.mrb[0].mxu0 %v244
    %v345 = vpop.f32.mrb[0].mxu0
    %v346 = vadd.f32 0.0, %v345
    %v347 = vpop.f32.mrb[0].mxu0
    %v348 = vpop.f32.mrb[0].mxu0
    %v349 = vadd.f32 0.0, %v348
    %v350 = vpop.f32.mrb[0].mxu0
    %351 = vdwg.mxu0
    %v352 = vadd.f32 %v245, %v346
    %v353 = vadd.f32 %v246, %v349
    %354 = vst [vmem:[#allocation9] sm:$0xff] %v352
    %355 = vst [vmem:[#allocation9 + $0x8] sm:$0xff] %v353
    // Predicated region
    $region46: #{tpu_custom_call.1} parent=1 // pred_check
      _
    $region47: #{tpu_custom_call.1} parent=1 // pred_check_branch
      %357 = sbr.rel (0) target = $region49
    $region48: #{tpu_custom_call.1} parent=1 // pred_region
      %s359 = ssub.s32 256, 256
      %360 = vsyncadd [#allocation5], %s359
      %s361 = sshll.u32 [#allocation9], 4
      %s362 = int_to_ptr.vmem [resolvable:$true] %s361
      %367 = dma.vmem_to_hbm [thread:$0]  %s362, 256, %s7, [#allocation5], 128, 128, 8
    $region49: #{tpu_custom_call.1} parent=1 // pred_fallthru
      _
    // Predicated region
    $region50: #{tpu_custom_call.1} parent=1 // pred_check
      _
    $region51: #{tpu_custom_call.1} parent=1 // pred_check_branch
      %369 = sbr.rel (0) target = $region53
    $region52: #{tpu_custom_call.1} parent=1 // pred_region
      %370 = dma.done [#allocation5], 256
    $region53: #{tpu_custom_call.1} parent=1 // pred_fallthru
      _
    %371 = vsyncpa [#allocation4], 1
    %372 = vsyncpa [#allocation7], 1
    %373 = vsyncpa [#allocation5], 1

</llo_original>
